<compile_context>
chip_gen: v7x
topology: tpu7x:2x2x1
jax: 0.10.0
libtpu: 0.0.40
codegen_flags: <defaults>
</compile_context>

<pallas_src>
import functools

import jax
import jax.numpy as jnp
from jax.experimental import pallas as pl
from jax.experimental.pallas import tpu as pltpu


def _se_block_kernel(x_ref, w1t_ref, w2t_ref, o_ref, *, C, HW, inv_hw, flat):
    # x_ref / o_ref: (B_blk, C, HW)  or, in the lane-dense flat layout, (B_blk, C*HW)
    # w1t_ref: (C, r), w2t_ref: (r, C)
    x = x_ref[...]
    b = x.shape[0]
    x3 = x.reshape(b, C, HW) if flat else x

    # Global average pool over the spatial axis (AdaptiveAvgPool2d((1, 1))).
    # Accumulate in f32; result (B_blk, C) is lane-dense (channels on lanes).
    pooled = jnp.sum(x3.astype(jnp.float32), axis=-1) * inv_hw

    # fc1 (no bias) + ReLU : (B_blk, C) @ (C, r) -> (B_blk, r)
    f1 = jnp.dot(pooled, w1t_ref[...], preferred_element_type=jnp.float32)
    f1 = jnp.maximum(f1, 0.0)

    # fc2 (no bias) : (B_blk, r) @ (r, C) -> (B_blk, C)
    f2 = jnp.dot(f1, w2t_ref[...], preferred_element_type=jnp.float32)

    # Hardsigmoid: relu6(x + 3) / 6 == clip(x/6 + 1/2, 0, 1); keep in f32, then
    # cast the tiny (B_blk, C) scale back to the activation dtype so the large
    # elementwise pass stays in the native dtype (no full-tile f32 widening).
    scale = jnp.clip(f2 * (1.0 / 6.0) + 0.5, 0.0, 1.0).astype(x.dtype)

    out3 = x3 * scale[:, :, None]
    o_ref[...] = out3.reshape(x.shape) if flat else out3


def _vmem_budget_bytes():
    """Generation-aware VMEM budget: ~half of physical VMEM, capped at 48 MiB.

    v5e/v6e have 128 MiB physical VMEM -> 48 MiB budget; v7x has 64 MiB -> 32 MiB.
    Falls back to a v7x-safe value if the query is unavailable.
    """
    cap = None
    try:
        cap = getattr(pltpu.get_tpu_info(), "vmem_capacity_bytes", None)
    except Exception:
        cap = None
    if not cap:
        cap = 64 * 1024 * 1024
    return min(cap // 2, 48 * 1024 * 1024)


def se_block(x, w1, w2, *, vmem_budget_bytes=None, donate_input=False):
    """SeBlock forward.

    x : (N, C, H, W)   activations (f32 or bf16; kernel is dtype-agnostic)
    w1: (r, C)         fc1.weight (torch.nn.Linear layout, out x in), r = C // 4
    w2: (C, r)         fc2.weight
    Returns (N, C, H, W).
    """
    N, C, H, W = x.shape
    r = w1.shape[0]
    HW = H * W

    if vmem_budget_bytes is None:
        vmem_budget_bytes = _vmem_budget_bytes()

    itemsize = jnp.dtype(x.dtype).itemsize
    w_itemsize = jnp.dtype(w1.dtype).itemsize
    sublane_min = {4: 8, 2: 16, 1: 32}.get(itemsize, 8)

    # ---- Lane-dense layout choice -----------------------------------------
    # A lane-dense output (last dim a multiple of 128) avoids masked vst.msk
    # partial stores on every row.  If HW itself is lane-dense keep the 3D
    # layout; otherwise flatten to (N, C*HW) when that is lane-dense.
    lane_dense_3d = (HW % 128 == 0)
    use_flat = (not lane_dense_3d) and ((C * HW) % 128 == 0)
    # TODO(synk): for MobileNetV3 SE stages where neither HW nor C*HW is a
    # multiple of 128 (e.g. C=960 at HW=49) a channels-last layout with padded
    # C would be needed for fully unmasked stores; we fall back to the
    # (masked but correct) 3D layout in that case.

    # Pre-transpose the weights once at trace time so both in-kernel dots
    # produce lane-dense row outputs.
    w1_t = jnp.transpose(w1)     # (C, r)
    w2_t = jnp.transpose(w2)     # (r, C)

    # ---- Batch block size: tile-size first ----------------------------------
    # Budget covers input + output data tiles, each double-buffered by the
    # Pallas pipeline (4 resident data slices), plus double-buffered weights.
    slice_bytes = C * HW * itemsize                       # one batch element
    weight_bytes = 2 * (w1.size + w2.size) * w_itemsize
    avail = max(vmem_budget_bytes - weight_bytes, 4 * slice_bytes)
    b_max = max(1, avail // (4 * slice_bytes))

    def _divisors(require_sublane_align):
        ds = []
        for d in range(1, N + 1):
            if N % d or d > b_max:
                continue
            # Flat 2D layout puts b_blk on the sublane axis: it must be a
            # multiple of the sublane tile or equal the full batch dim.
            if require_sublane_align and d != N and d % sublane_min != 0:
                continue
            ds.append(d)
        return ds

    divisors = _divisors(use_flat)
    if not divisors:                 # flat layout cannot be tiled legally here
        use_flat = False
        divisors = _divisors(False)

    b_full = max(divisors)           # largest legal block within the budget

    # Only shrink the block to get >= 2 grid steps if each step still moves a
    # tile of at least ~1 MiB; otherwise fewer, larger steps win (grid may be 1).
    MIN_TILE_BYTES = 1 << 20
    split = [d for d in divisors
             if N // d >= 2 and d * slice_bytes >= MIN_TILE_BYTES]
    if split:
        even = [d for d in split if (N // d) % 2 == 0]    # balance v7x's 2 TCs
        b_blk = max(even) if even else max(split)
    else:
        b_blk = b_full
    grid = (N // b_blk,)

    # ---- Specs ---------------------------------------------------------------
    if use_flat:
        x_in = x.reshape(N, C * HW)
        data_spec = pl.BlockSpec((b_blk, C * HW), lambda b: (b, 0))
        out_shape = jax.ShapeDtypeStruct((N, C * HW), x.dtype)
    else:
        x_in = x.reshape(N, C, HW)
        data_spec = pl.BlockSpec((b_blk, C, HW), lambda b: (b, 0, 0))
        out_shape = jax.ShapeDtypeStruct((N, C, HW), x.dtype)

    kernel = functools.partial(_se_block_kernel, C=C, HW=HW,
                               inv_hw=1.0 / HW, flat=use_flat)

    out = pl.pallas_call(
        kernel,
        out_shape=out_shape,
        grid_spec=pltpu.PrefetchScalarGridSpec(
            num_scalar_prefetch=0,
            grid=grid,
            in_specs=[
                data_spec,
                pl.BlockSpec((C, r), lambda b: (0, 0)),   # constant index: fetched once
                pl.BlockSpec((r, C), lambda b: (0, 0)),   # constant index: fetched once
            ],
            out_specs=data_spec,
        ),
        compiler_params=pltpu.CompilerParams(
            dimension_semantics=("parallel",),
            vmem_limit_bytes=int(vmem_budget_bytes + (8 << 20)),
        ),
        cost_estimate=pl.CostEstimate(
            flops=2 * N * C * HW + 4 * N * C * r,
            transcendentals=0,
            bytes_accessed=2 * N * C * HW * itemsize
            + (w1.size + w2.size) * w_itemsize),
        input_output_aliases=({0: 0} if donate_input else {}),
    )(x_in, w1_t, w2_t)

    return out.reshape(N, C, H, W)


def _reference(x, w1, w2):
    # Pure-JAX reference of the PyTorch forward (for sanity checking).
    pooled = jnp.mean(x, axis=(2, 3))                        # (N, C)
    f = jnp.maximum(pooled @ w1.T, 0.0)                      # (N, r)
    f = jnp.clip((f @ w2.T) / 6.0 + 0.5, 0.0, 1.0)           # (N, C)
    return x * f[:, :, None, None]


if __name__ == "__main__":
    key = jax.random.PRNGKey(0)
    N, C, H, W = 2, 16, 16, 16          # small shapes; r = C // 4 = 4
    r = C // 4

    kx, k1, k2 = jax.random.split(key, 3)
    x = jax.random.normal(kx, (N, C, H, W), dtype=jnp.float32)
    # Deterministic synthetic weights (torch.nn.Linear layout: (out, in)).
    w1 = jax.random.normal(k1, (r, C), dtype=jnp.float32) * 0.1
    w2 = jax.random.normal(k2, (C, r), dtype=jnp.float32) * 0.1

    out = jax.block_until_ready(se_block(x, w1, w2))

    ref = _reference(x, w1, w2)
    assert out.shape == (N, C, H, W)
    assert jnp.allclose(out, ref, atol=1e-5, rtol=1e-5), "mismatch vs reference"

    print("KERNEL_OK")
</pallas_src>

<mosaic_0001>
module attributes {stable_mosaic.version = 11 : i64} {
  func.func @_se_block_kernel(%arg0: i32, %arg1: memref<2x16x256xf32, #tpu.memory_space<vmem>>, %arg2: memref<16x4xf32, #tpu.memory_space<vmem>>, %arg3: memref<4x16xf32, #tpu.memory_space<vmem>>, %arg4: memref<2x16x256xf32, #tpu.memory_space<vmem>>) attributes {dimension_semantics = [#tpu.dimension_semantics<parallel>], iteration_bounds = array<i64: 1>, scalar_prefetch = 0 : i64, scratch_operands = 0 : i64, tpu.core_type = #tpu.core_type<tc>, window_params = [{transform_indices = @transform_0, window_bounds = array<i64: 2, 16, 256>}, {pipeline_mode = #tpu.pipeline_mode<synchronous>, transform_indices = @transform_1, window_bounds = array<i64: 16, 4>}, {pipeline_mode = #tpu.pipeline_mode<synchronous>, transform_indices = @transform_2, window_bounds = array<i64: 4, 16>}, {transform_indices = @transform_3, window_bounds = array<i64: 2, 16, 256>}]} {
    %c0 = arith.constant 0 : index
    %c0_0 = arith.constant 0 : index
    %c0_1 = arith.constant 0 : index
    %0 = vector.load %arg1[%c0, %c0_0, %c0_1] : memref<2x16x256xf32, #tpu.memory_space<vmem>>, vector<2x16x256xf32>
    %cst = arith.constant dense<0.000000e+00> : vector<2x16xf32>
    %1 = vector.multi_reduction <add>, %0, %cst [2] : vector<2x16x256xf32> to vector<2x16xf32>
    %cst_2 = arith.constant 3.906250e-03 : f32
    %2 = vector.broadcast %cst_2 : f32 to vector<2x16xf32>
    %3 = arith.mulf %1, %2 : vector<2x16xf32>
    %c0_3 = arith.constant 0 : index
    %c0_4 = arith.constant 0 : index
    %4 = vector.load %arg2[%c0_3, %c0_4] : memref<16x4xf32, #tpu.memory_space<vmem>>, vector<16x4xf32>
    %cst_5 = arith.constant dense<0.000000e+00> : vector<2x4xf32>
    %5 = tpu.matmul %3, %4, %cst_5 {dimension_numbers = #tpu.dot_dimension_numbers<[1], [0], [0], [1], [0, 0, 1, 1], [], []>} : vector<2x16xf32>, vector<16x4xf32>, vector<2x4xf32> -> vector<2x4xf32>
    %cst_6 = arith.constant 0.000000e+00 : f32
    %6 = vector.broadcast %cst_6 : f32 to vector<2x4xf32>
    %7 = arith.maximumf %5, %6 : vector<2x4xf32>
    %c0_7 = arith.constant 0 : index
    %c0_8 = arith.constant 0 : index
    %8 = vector.load %arg3[%c0_7, %c0_8] : memref<4x16xf32, #tpu.memory_space<vmem>>, vector<4x16xf32>
    %cst_9 = arith.constant dense<0.000000e+00> : vector<2x16xf32>
    %9 = tpu.matmul %7, %8, %cst_9 {dimension_numbers = #tpu.dot_dimension_numbers<[1], [0], [0], [1], [0, 0, 1, 1], [], []>} : vector<2x4xf32>, vector<4x16xf32>, vector<2x16xf32> -> vector<2x16xf32>
    %cst_10 = arith.constant 0.166666672 : f32
    %10 = vector.broadcast %cst_10 : f32 to vector<2x16xf32>
    %11 = arith.mulf %9, %10 : vector<2x16xf32>
    %cst_11 = arith.constant 5.000000e-01 : f32
    %12 = vector.broadcast %cst_11 : f32 to vector<2x16xf32>
    %13 = arith.addf %11, %12 : vector<2x16xf32>
    %cst_12 = arith.constant 0.000000e+00 : f32
    %cst_13 = arith.constant 1.000000e+00 : f32
    %14 = vector.broadcast %cst_12 : f32 to vector<2x16xf32>
    %15 = arith.maximumf %14, %13 : vector<2x16xf32>
    %16 = vector.broadcast %cst_13 : f32 to vector<2x16xf32>
    %17 = arith.minimumf %16, %15 : vector<2x16xf32>
    %18 = vector.shape_cast %17 : vector<2x16xf32> to vector<2x16x1xf32>
    %19 = vector.broadcast %18 : vector<2x16x1xf32> to vector<2x16x256xf32>
    %20 = arith.mulf %0, %19 : vector<2x16x256xf32>
    %c0_14 = arith.constant 0 : index
    %c0_15 = arith.constant 0 : index
    %c0_16 = arith.constant 0 : index
    %21 = vector.load %arg4[%c0_14, %c0_15, %c0_16] : memref<2x16x256xf32, #tpu.memory_space<vmem>>, vector<2x16x256xf32>
    tpu.vector_store %arg4[%c0_14, %c0_15, %c0_16], %20 {strides = array<i32>} : memref<2x16x256xf32, #tpu.memory_space<vmem>>, vector<2x16x256xf32>,
    return
  }
  func.func @transform_0(%arg0: i32) -> (i32, i32, i32) {
    %c0_i32 = arith.constant 0 : i32
    %c0_i32_0 = arith.constant 0 : i32
    %c0_i32_1 = arith.constant 0 : i32
    return %arg0, %c0_i32, %c0_i32_0 : i32, i32, i32
  }
  func.func @transform_1(%arg0: i32) -> (i32, i32) {
    %c0_i32 = arith.constant 0 : i32
    %c0_i32_0 = arith.constant 0 : i32
    %c0_i32_1 = arith.constant 0 : i32
    return %c0_i32, %c0_i32_0 : i32, i32
  }
  func.func @transform_2(%arg0: i32) -> (i32, i32) {
    %c0_i32 = arith.constant 0 : i32
    %c0_i32_0 = arith.constant 0 : i32
    %c0_i32_1 = arith.constant 0 : i32
    return %c0_i32, %c0_i32_0 : i32, i32
  }
  func.func @transform_3(%arg0: i32) -> (i32, i32, i32) {
    %c0_i32 = arith.constant 0 : i32
    %c0_i32_0 = arith.constant 0 : i32
    %c0_i32_1 = arith.constant 0 : i32
    return %arg0, %c0_i32, %c0_i32_0 : i32, i32, i32
  }
}

</mosaic_0001>

<llo_original>
// kernel: tpu_custom_call.1
$region0: #{tpu_custom_call.1}
  #allocation0 [shape = 'u32[]', space=smem, size = 0x4, offset = 0x4, fixed_abs, tag = 'smem constant byte address 0x4 - core index']
  #allocation1 [shape = 'u32[144,128]{1,0:T(1,128)}', space=vmem, size = 0x12000, scoped, tag = 'internal scratch']
  %s0 = inlined_call_operand.hbm [shape: f32[2,16,256], index: 0, kind: input, shape index: {}]
  %s1 = inlined_call_operand.vmem [shape: f32[16,4], index: 1, kind: input, shape index: {}]
  %s2 = inlined_call_operand.vmem [shape: f32[4,16], index: 2, kind: input, shape index: {}]
  %s3 = inlined_call_operand.hbm [shape: f32[2,16,256], index: 3, kind: output, shape index: {}]
  %s4 = sld [smem:[#allocation0]]
  $region26: #{tpu_custom_call.1} parent=0
    _
  %s6 = ssub.s32 1, %s4
  %s7 = scalar_select 0, %s6, %s4
  $region1: #{tpu_custom_call.1} parent=0
    #allocation2 [shape = 'u8[32768]{0}', space=vmem, size = 0x8000, scoped, tag = 'input window, operand 0, single buffered']
    #allocation3 [shape = 's32[1]{0}', space=sflag, size = 0x4, scoped, tag = 'scoped memory for tpu_custom_call.1']
    #allocation4 [shape = 's32[1]{0}', space=sflag, size = 0x4, scoped, tag = 'scoped memory for tpu_custom_call.1']
    #allocation5 [shape = 'u8[32768]{0}', space=vmem, size = 0x8000, scoped, tag = 'output window, operand 0, single buffered']
    %8 = vsyncpa [#allocation3], 0
    %9 = vsyncpa [#allocation4], 0
    // Predicated region
    $region2: #{tpu_custom_call.1} parent=1 // pred_check
      _
    $region3: #{tpu_custom_call.1} parent=1 // pred_check_branch
      %11 = sbr.rel (0) target = $region5
    $region4: #{tpu_custom_call.1} parent=1 // pred_region
      %s13 = ssub.s32 1024, 1024
      %14 = vsyncadd [#allocation3], %s13
      %s15 = sshll.u32 [#allocation2], 4
      %s16 = int_to_ptr.vmem [resolvable:$true] %s15
      %21 = dma.hbm_to_vmem [thread:$0]  %s0, 1024, %s16, [#allocation3], 256, 256, 16
    $region5: #{tpu_custom_call.1} parent=1 // pred_fallthru
      _
    // Predicated region
    $region6: #{tpu_custom_call.1} parent=1 // pred_check
      _
    $region7: #{tpu_custom_call.1} parent=1 // pred_check_branch
      %23 = sbr.rel (0) target = $region9
    $region8: #{tpu_custom_call.1} parent=1 // pred_region
      _
    $region9: #{tpu_custom_call.1} parent=1 // pred_fallthru
      _
    // Predicated region
    $region10: #{tpu_custom_call.1} parent=1 // pred_check
      _
    $region11: #{tpu_custom_call.1} parent=1 // pred_check_branch
      %25 = sbr.rel (0) target = $region13
    $region12: #{tpu_custom_call.1} parent=1 // pred_region
      _
    $region13: #{tpu_custom_call.1} parent=1 // pred_fallthru
      _
    // Predicated region
    $region14: #{tpu_custom_call.1} parent=1 // pred_check
      _
    $region15: #{tpu_custom_call.1} parent=1 // pred_check_branch
      %27 = sbr.rel (0) target = $region17
    $region16: #{tpu_custom_call.1} parent=1 // pred_region
      %28 = dma.done [#allocation3], 1024
    $region17: #{tpu_custom_call.1} parent=1 // pred_fallthru
      _
    %v29 = vld [vmem:[#allocation2] sm:$0xff]
    %v30 = vld [vmem:[#allocation2 + $0x8] sm:$0xff]
    %v31 = vld [vmem:[#allocation2 + $0x10] sm:$0xff]
    %v32 = vld [vmem:[#allocation2 + $0x18] sm:$0xff]
    %v33 = vld [vmem:[#allocation2 + $0x20] sm:$0xff]
    %v34 = vld [vmem:[#allocation2 + $0x28] sm:$0xff]
    %v35 = vld [vmem:[#allocation2 + $0x30] sm:$0xff]
    %v36 = vld [vmem:[#allocation2 + $0x38] sm:$0xff]
    %v37 = vadd.f32 %v29, %v30
    %38 = vadd.xlane.f32.xlu0 %v37
    %v39 = vpop.xlane.xlu0 %38
    %v40 = vadd.f32 %v31, %v32
    %41 = vadd.xlane.f32.xlu0 %v40
    %v42 = vpop.xlane.xlu0 %41
    %v43 = vadd.f32 %v33, %v34
    %44 = vadd.xlane.f32.xlu0 %v43
    %v45 = vpop.xlane.xlu0 %44
    %v46 = vadd.f32 %v35, %v36
    %47 = vadd.xlane.f32.xlu0 %v46
    %v48 = vpop.xlane.xlu0 %47
    %v49 = vmul.f32 %v39, 0.00390625
    %v50 = vmul.f32 %v42, 0.00390625
    %v51 = vmul.f32 %v45, 0.00390625
    %v52 = vmul.f32 %v48, 0.00390625
    %v53 = vld [vmem:[%s1] sm:$0xff]
    %v54 = vld [vmem:[%s1 + $0x8] sm:$0xff]
    %v59 = vlaneseq
    %v60 = vand.u32 %v59, 127
    %v61 = vlaneseq
    %v62 = vshrl.u32 %v61, 7
    %v63 = vsub.s32 %v60, %v62
    %v64 = vrot.slane %v49, %v63
    %v65 = vadd.s32 %v60, 4294967288
    %v66 = vlaneseq
    %v67 = vshrl.u32 %v66, 7
    %v68 = vsub.s32 %v65, %v67
    %v69 = vrot.slane %v50, %v68
    %vm70 = vcmask 130112
    %v71 = vsel %vm70, %v69, %v64
    %v72 = vlaneseq
    %v73 = vshrl.u32 %v72, 7
    %v74 = vsub.s32 %v60, %v73
    %v75 = vrot.slane %v51, %v74
    %v76 = vlaneseq
    %v77 = vshrl.u32 %v76, 7
    %v78 = vsub.s32 %v65, %v77
    %v79 = vrot.slane %v52, %v78
    %v80 = vsel %vm70, %v79, %v75
    %vm81 = vcmask 1041409
    %v82 = vsel %vm81, %v80, %v71
    %vm83 = vcmask 130048
    %v84 = vsel %vm83, %v82, 0
    %86 = vmatprep.subr.mxu0 0.0
    %87 = vmatpush1.msra.mxu0 %v53
    %88 = vmatprep.subr.mxu0 0.0
    %89 = vmatpush1.msra.mxu0 %v54
    %90 = vmatprep.subr.mxu0 0.0
    %91 = vmatpush1.msra.mxu0 0.0
    %92 = vmatprep.subr.mxu0 0.0
    %93 = vmatpush1.msra.mxu0 0.0
    %94 = vmatprep.subr.mxu0 0.0
    %95 = vmatpush1.msra.mxu0 0.0
    %96 = vmatprep.subr.mxu0 0.0
    %97 = vmatpush1.msra.mxu0 0.0
    %98 = vmatprep.subr.mxu0 0.0
    %99 = vmatpush1.msra.mxu0 0.0
    %100 = vmatprep.subr.mxu0 0.0
    %101 = vmatpush1.msra.mxu0 0.0
    %102 = vmatprep.subr.mxu0 0.0
    %103 = vmatpush1.msra.mxu0 0.0
    %104 = vmatprep.subr.mxu0 0.0
    %105 = vmatpush1.msra.mxu0 0.0
    %106 = vmatprep.subr.mxu0 0.0
    %107 = vmatpush1.msra.mxu0 0.0
    %108 = vmatprep.subr.mxu0 0.0
    %109 = vmatpush1.msra.mxu0 0.0
    %110 = vmatprep.subr.mxu0 0.0
    %111 = vmatpush1.msra.mxu0 0.0
    %112 = vmatprep.subr.mxu0 0.0
    %113 = vmatpush1.msra.mxu0 0.0
    %114 = vmatprep.subr.mxu0 0.0
    %115 = vmatpush1.msra.mxu0 0.0
    %116 = vmatprep.subr.mxu0 0.0
    %117 = vmatpush1.msra.mxu0 0.0
    %118 = vmatprep.subr.mxu0 0.0
    %119 = vmatpush1.msra.mxu0 0.0
    %120 = vmatprep.subr.mxu0 0.0
    %121 = vmatpush1.msra.mxu0 0.0
    %122 = vmatprep.subr.mxu0 0.0
    %123 = vmatpush1.msra.mxu0 0.0
    %124 = vmatprep.subr.mxu0 0.0
    %125 = vmatpush1.msra.mxu0 0.0
    %126 = vmatprep.subr.mxu0 0.0
    %127 = vmatpush1.msra.mxu0 0.0
    %128 = vmatprep.subr.mxu0 0.0
    %129 = vmatpush1.msra.mxu0 0.0
    %130 = vmatprep.subr.mxu0 0.0
    %131 = vmatpush1.msra.mxu0 0.0
    %132 = vmatprep.subr.mxu0 0.0
    %133 = vmatpush1.msra.mxu0 0.0
    %134 = vmatprep.subr.mxu0 0.0
    %135 = vmatpush1.msra.mxu0 0.0
    %136 = vmatprep.subr.mxu0 0.0
    %137 = vmatpush1.msra.mxu0 0.0
    %138 = vmatprep.subr.mxu0 0.0
    %139 = vmatpush1.msra.mxu0 0.0
    %140 = vmatprep.subr.mxu0 0.0
    %141 = vmatpush1.msra.mxu0 0.0
    %142 = vmatprep.subr.mxu0 0.0
    %143 = vmatpush1.msra.mxu0 0.0
    %144 = vmatprep.subr.mxu0 0.0
    %145 = vmatpush1.msra.mxu0 0.0
    %146 = vmatprep.subr.mxu0 0.0
    %147 = vmatpush1.msra.mxu0 0.0
    %148 = vmatprep.subr.mxu0 0.0
    %149 = vmatpush1.msra.mxu0 0.0
    %150 = vmatprep.mubr.f32.mxu0 0.0
    %151 = vmatmul.mubr.f32.gmra.mrb[0].mxu0 %v84
    %v152 = vpop.f32.mrb[0].mxu0
    %v153 = vadd.f32 0.0, %v152
    %v154 = vpop.f32.mrb[0].mxu0
    %155 = vdwg.mxu0
    %v156 = vmax.f32 %v153, 0.0
    %v157 = vld [vmem:[%s2] sm:$0xf]
    %vm158 = vcmask 31744
    %v160 = vsel %vm158, %v156, 0
    %vm162 = vcmask 1043456
    %v164 = vsel %vm162, %v157, 0
    %166 = vmatprep.subr.mxu0 0.0
    %167 = vmatpush1.msra.mxu0 %v164
    %168 = vmatprep.subr.mxu0 0.0
    %169 = vmatpush1.msra.mxu0 0.0
    %170 = vmatprep.subr.mxu0 0.0
    %171 = vmatpush1.msra.mxu0 0.0
    %172 = vmatprep.subr.mxu0 0.0
    %173 = vmatpush1.msra.mxu0 0.0
    %174 = vmatprep.subr.mxu0 0.0
    %175 = vmatpush1.msra.mxu0 0.0
    %176 = vmatprep.subr.mxu0 0.0
    %177 = vmatpush1.msra.mxu0 0.0
    %178 = vmatprep.subr.mxu0 0.0
    %179 = vmatpush1.msra.mxu0 0.0
    %180 = vmatprep.subr.mxu0 0.0
    %181 = vmatpush1.msra.mxu0 0.0
    %182 = vmatprep.subr.mxu0 0.0
    %183 = vmatpush1.msra.mxu0 0.0
    %184 = vmatprep.subr.mxu0 0.0
    %185 = vmatpush1.msra.mxu0 0.0
    %186 = vmatprep.subr.mxu0 0.0
    %187 = vmatpush1.msra.mxu0 0.0
    %188 = vmatprep.subr.mxu0 0.0
    %189 = vmatpush1.msra.mxu0 0.0
    %190 = vmatprep.subr.mxu0 0.0
    %191 = vmatpush1.msra.mxu0 0.0
    %192 = vmatprep.subr.mxu0 0.0
    %193 = vmatpush1.msra.mxu0 0.0
    %194 = vmatprep.subr.mxu0 0.0
    %195 = vmatpush1.msra.mxu0 0.0
    %196 = vmatprep.subr.mxu0 0.0
    %197 = vmatpush1.msra.mxu0 0.0
    %198 = vmatprep.subr.mxu0 0.0
    %199 = vmatpush1.msra.mxu0 0.0
    %200 = vmatprep.subr.mxu0 0.0
    %201 = vmatpush1.msra.mxu0 0.0
    %202 = vmatprep.subr.mxu0 0.0
    %203 = vmatpush1.msra.mxu0 0.0
    %204 = vmatprep.subr.mxu0 0.0
    %205 = vmatpush1.msra.mxu0 0.0
    %206 = vmatprep.subr.mxu0 0.0
    %207 = vmatpush1.msra.mxu0 0.0
    %208 = vmatprep.subr.mxu0 0.0
    %209 = vmatpush1.msra.mxu0 0.0
    %210 = vmatprep.subr.mxu0 0.0
    %211 = vmatpush1.msra.mxu0 0.0
    %212 = vmatprep.subr.mxu0 0.0
    %213 = vmatpush1.msra.mxu0 0.0
    %214 = vmatprep.subr.mxu0 0.0
    %215 = vmatpush1.msra.mxu0 0.0
    %216 = vmatprep.subr.mxu0 0.0
    %217 = vmatpush1.msra.mxu0 0.0
    %218 = vmatprep.subr.mxu0 0.0
    %219 = vmatpush1.msra.mxu0 0.0
    %220 = vmatprep.subr.mxu0 0.0
    %221 = vmatpush1.msra.mxu0 0.0
    %222 = vmatprep.subr.mxu0 0.0
    %223 = vmatpush1.msra.mxu0 0.0
    %224 = vmatprep.subr.mxu0 0.0
    %225 = vmatpush1.msra.mxu0 0.0
    %226 = vmatprep.subr.mxu0 0.0
    %227 = vmatpush1.msra.mxu0 0.0
    %228 = vmatprep.subr.mxu0 0.0
    %229 = vmatpush1.msra.mxu0 0.0
    %230 = vmatprep.mubr.f32.mxu0 0.0
    %231 = vmatmul.mubr.f32.gmra.mrb[0].mxu0 %v160
    %v232 = vpop.f32.mrb[0].mxu0
    %v233 = vadd.f32 0.0, %v232
    %v234 = vpop.f32.mrb[0].mxu0
    %235 = vdwg.mxu0
    %v236 = vmul.f32 %v233, 0.16666667
    %v237 = vadd.f32 %v236, 0.5
    %v238 = vmax.f32 %v237, 0.0
    %v239 = vmin.f32 %v238, 1.0
    %v240 = vlaneseq
    %v241 = vshrl.u32 %v240, 7
    %v242 = vsub.s32 0, %v241
    %v243 = vrot.slane %v239, %v242
    %245 = vbcast.lane.b32.xlu0 %v243, 256
    %v246 = vpop.permute.xlu0 %245
    %s248 = sor.u32 256, 8
    %249 = vbcast.lane.b32.xlu0 %v243, %s248
    %v250 = vpop.permute.xlu0 %249
    %v251 = vlaneseq
    %v252 = vshrl.u32 %v251, 7
    %v253 = vsub.s32 1, %v252
    %v254 = vrot.slane %v239, %v253
    %256 = vbcast.lane.b32.xlu0 %v254, 256
    %v257 = vpop.permute.xlu0 %256
    %s259 = sor.u32 256, 8
    %260 = vbcast.lane.b32.xlu0 %v254, %s259
    %v261 = vpop.permute.xlu0 %260
    %v262 = vmul.f32 %v29, %v246
    %v263 = vmul.f32 %v30, %v246
    %v264 = vmul.f32 %v31, %v250
    %v265 = vmul.f32 %v32, %v250
    %v266 = vmul.f32 %v33, %v257
    %v267 = vmul.f32 %v34, %v257
    %v268 = vmul.f32 %v35, %v261
    %v269 = vmul.f32 %v36, %v261
    %270 = vst [vmem:[#allocation5] sm:$0xff] %v262
    %271 = vst [vmem:[#allocation5 + $0x8] sm:$0xff] %v263
    %272 = vst [vmem:[#allocation5 + $0x10] sm:$0xff] %v264
    %273 = vst [vmem:[#allocation5 + $0x18] sm:$0xff] %v265
    %274 = vst [vmem:[#allocation5 + $0x20] sm:$0xff] %v266
    %275 = vst [vmem:[#allocation5 + $0x28] sm:$0xff] %v267
    %276 = vst [vmem:[#allocation5 + $0x30] sm:$0xff] %v268
    %277 = vst [vmem:[#allocation5 + $0x38] sm:$0xff] %v269
    // Predicated region
    $region18: #{tpu_custom_call.1} parent=1 // pred_check
      _
    $region19: #{tpu_custom_call.1} parent=1 // pred_check_branch
      %279 = sbr.rel (0) target = $region21
    $region20: #{tpu_custom_call.1} parent=1 // pred_region
      %s281 = ssub.s32 1024, 1024
      %282 = vsyncadd [#allocation4], %s281
      %s283 = sshll.u32 [#allocation5], 4
      %s284 = int_to_ptr.vmem [resolvable:$true] %s283
      %289 = dma.vmem_to_hbm [thread:$0]  %s284, 1024, %s3, [#allocation4], 256, 256, 16
    $region21: #{tpu_custom_call.1} parent=1 // pred_fallthru
      _
    // Predicated region
    $region22: #{tpu_custom_call.1} parent=1 // pred_check
      _
    $region23: #{tpu_custom_call.1} parent=1 // pred_check_branch
      %291 = sbr.rel (0) target = $region25
    $region24: #{tpu_custom_call.1} parent=1 // pred_region
      %292 = dma.done [#allocation4], 1024
    $region25: #{tpu_custom_call.1} parent=1 // pred_fallthru
      _
    %293 = vsyncpa [#allocation3], 1
    %294 = vsyncpa [#allocation4], 1

</llo_original>
